<compile_context>
chip_gen: v6e
topology: v6e:2x2x1
jax: 0.10.0
libtpu: 0.0.40
codegen_flags: <defaults>
</compile_context>

<pallas_src>
import numpy as np
import jax
import jax.numpy as jnp
from jax.experimental import pallas as pl
from jax.experimental.pallas import tpu as pltpu

TOPK = 9
NUM_CLASSES = 80
EPS_INSIDE = 1e-9     # check_points_inside_bboxes eps
EPS_IOU = 1e-6        # BboxOverlaps2D-style union clamp
EPS_PIOU = 1e-9       # batch_iou_similarity eps (pred_bboxes branch)
MAX_LANE_TILE = 8192  # hard cap on the anchor-axis tile (multiple of 128)


def _round_up(x, m):
    return ((x + m - 1) // m) * m


def _vmem_config():
    """Generation-aware VMEM sizing: (compiler vmem limit, pipeline byte budget)."""
    cap = 128 << 20
    get_info = getattr(pltpu, "get_tpu_info", None)
    if get_info is not None:
        try:
            cap = int(getattr(get_info(), "vmem_capacity_bytes", cap))
        except Exception:
            pass
    # 48 MiB on v7x (64 MiB physical), 96 MiB on v5e/v6e (128 MiB physical).
    vmem_limit = int(max(min(cap * 3 // 4, 96 << 20), 16 << 20))
    budget = vmem_limit // 3   # headroom for double-buffering + compiler scratch
    return vmem_limit, budget


def _choose_tiling(B, M, L, budget_bytes):
    """Largest lane tile that keeps the pipelined VMEM working set in budget."""
    Lp128 = _round_up(L, 128)
    per_lane = (M * (2 * 4      # kernel-1 dist2 out (f32, double buffered)
                     + 2 * 2    # kernel-2 is_in_topk in (bf16, double buffered)
                     + 8 * 4)   # kernel-2 in-VMEM f32 intermediates (iou/masks/iota/..)
                + 16 * 4)       # anchor / pred / per-anchor output rows (tiny)
    max_tile = max(128, min(MAX_LANE_TILE, (budget_bytes // per_lane) // 128 * 128))
    n_l = -(-Lp128 // max_tile)                       # ceil
    l_tile = _round_up(-(-Lp128 // n_l), 128)         # even split, 128-aligned
    Lp = l_tile * n_l
    # keep >= 2 total grid steps so both v7x TensorCores get work (megacore)
    if B * n_l < 2 and Lp % 256 == 0:
        l_tile = Lp // 2
        n_l = 2
    return l_tile, Lp


# ----------------------------- Pallas kernels ----------------------------- #

def _dist2_kernel(gt_ref, anc_ref, dist2_ref):
    """Squared gt-center <-> anchor-center distance (sqrt is monotonic; only the
    per-level top_k ranking consumes this)."""
    gt = gt_ref[0]            # [M, 4]  (x1, y1, x2, y2)
    anc = anc_ref[...]        # [4, Lt]
    gcx = (gt[:, 0:1] + gt[:, 2:3]) * 0.5
    gcy = (gt[:, 1:2] + gt[:, 3:4]) * 0.5
    acx = (anc[0:1, :] + anc[2:3, :]) * 0.5
    acy = (anc[1:2, :] + anc[3:4, :]) * 0.5
    dx = gcx - acx
    dy = gcy - acy
    dist2_ref[0] = dx * dx + dy * dy


def _make_assign_kernel(with_pred):
    def kernel(gt_ref, anc_ref, iit_ref, thr_ref, *rest):
        if with_pred:
            pred_ref, mps_ref, agi_ref, pio_ref = rest
        else:
            mps_ref, agi_ref = rest

        gt = gt_ref[0]                           # [M, 4]
        anc = anc_ref[...]                       # [4, Lt]
        iit = iit_ref[0].astype(jnp.float32)     # [M, Lt] raw is_in_topk (bf16 in HBM)
        thr = thr_ref[0]                         # [M, 1]  mean+std IoU threshold
        M, Lt = iit.shape
        iota_m = jax.lax.broadcasted_iota(jnp.int32, (M, Lt), 0)

        gx1 = gt[:, 0:1]; gy1 = gt[:, 1:2]; gx2 = gt[:, 2:3]; gy2 = gt[:, 3:4]
        ax1 = anc[0:1, :]; ay1 = anc[1:2, :]; ax2 = anc[2:3, :]; ay2 = anc[3:4, :]

        # pairwise gt<->anchor IoU recomputed in VMEM (~10 VPU ops/elem) — cheaper
        # than streaming an f32 [B, M, L] tensor from HBM.
        area_g = (gx2 - gx1) * (gy2 - gy1)
        area_a = (ax2 - ax1) * (ay2 - ay1)
        iw = jnp.maximum(jnp.minimum(gx2, ax2) - jnp.maximum(gx1, ax1), 0.0)
        ih = jnp.maximum(jnp.minimum(gy2, ay2) - jnp.maximum(gy1, ay1), 0.0)
        inter = iw * ih
        ious = inter / jnp.maximum(area_g + area_a - inter, EPS_IOU)

        # mean+std IoU threshold masking (fused; was a separate XLA pass)
        iit = jnp.where(ious * iit > thr, iit, 0.0)

        # check_points_inside_bboxes computed locally (no [B, M, L] HBM round trip)
        acx = (ax1 + ax2) * 0.5; acy = (ay1 + ay2) * 0.5
        dl = acx - gx1; dt = acy - gy1; dr = gx2 - acx; db = gy2 - acy
        mind = jnp.minimum(jnp.minimum(dl, dt), jnp.minimum(dr, db))
        igt = (mind > EPS_INSIDE).astype(jnp.float32)

        # is_in_topk rows of padded gts are guaranteed zero by the glue
        # (_gather_topk_pyramid), so no pad_gt_mask stream is needed here.
        mask_pos = iit * igt
        mps = jnp.sum(mask_pos, axis=0, keepdims=True)               # [1, Lt]

        # anchors matched to multiple gts keep only the (first-occurrence) max-IoU gt
        max_iou = jnp.max(ious, axis=0, keepdims=True)
        first_max = jnp.min(jnp.where(ious == max_iou, iota_m, M),
                            axis=0, keepdims=True)
        is_max_iou = (iota_m == first_max).astype(jnp.float32)
        mask_pos = jnp.where(mps > 1.0, is_max_iou, mask_pos)
        mps = jnp.minimum(mps, 1.0)

        # assigned gt index = first row where mask_pos is 1; clamp to 0 for negatives
        agi = jnp.min(jnp.where(mask_pos > 0.0, iota_m, M), axis=0, keepdims=True)
        agi = jnp.where(mps > 0.0, agi, 0)

        mps_ref[0] = mps
        agi_ref[0] = agi.astype(jnp.int32)

        if with_pred:
            # fused batch_iou_similarity(gt, pred) * mask_positive, max over gts —
            # avoids materializing [B, M, L] mask_positive and pious in HBM.
            pred = pred_ref[0]                   # [4, Lt]
            px1 = pred[0:1, :]; py1 = pred[1:2, :]; px2 = pred[2:3, :]; py2 = pred[3:4, :]
            p_area_g = jnp.maximum(gx2 - gx1, 0.0) * jnp.maximum(gy2 - gy1, 0.0)
            p_area_p = jnp.maximum(px2 - px1, 0.0) * jnp.maximum(py2 - py1, 0.0)
            piw = jnp.maximum(jnp.minimum(gx2, px2) - jnp.maximum(gx1, px1), 0.0)
            pih = jnp.maximum(jnp.minimum(gy2, py2) - jnp.maximum(gy1, py1), 0.0)
            pinter = piw * pih
            pious = pinter / (p_area_g + p_area_p - pinter + EPS_PIOU)
            pio_ref[0] = jnp.max(pious * mask_pos, axis=0, keepdims=True)

    return kernel


# ------------------------------ pallas_call wrappers ----------------------- #

def _gt2anchor_dist2(gt_bboxes, anc_t, l_tile, vmem_limit):
    B, M, _ = gt_bboxes.shape
    Lp = anc_t.shape[1]
    n_l = Lp // l_tile
    return pl.pallas_call(
        _dist2_kernel,
        out_shape=jax.ShapeDtypeStruct((B, M, Lp), jnp.float32),
        grid=(B, n_l),
        in_specs=[pl.BlockSpec((1, M, 4), lambda b, l: (b, 0, 0)),
                  pl.BlockSpec((4, l_tile), lambda b, l: (0, l))],
        out_specs=pl.BlockSpec((1, M, l_tile), lambda b, l: (b, 0, l)),
        compiler_params=pltpu.CompilerParams(
            dimension_semantics=("parallel", "parallel"),
            vmem_limit_bytes=vmem_limit),
    )(gt_bboxes, anc_t)


def _positive_assignment(gt_bboxes, anc_t, is_in_topk, iou_threshold,
                         pred_t, l_tile, vmem_limit):
    B, M, Lp = is_in_topk.shape
    n_l = Lp // l_tile
    with_pred = pred_t is not None
    in_specs = [pl.BlockSpec((1, M, 4), lambda b, l: (b, 0, 0)),
                pl.BlockSpec((4, l_tile), lambda b, l: (0, l)),
                pl.BlockSpec((1, M, l_tile), lambda b, l: (b, 0, l)),
                pl.BlockSpec((1, M, 1), lambda b, l: (b, 0, 0))]
    inputs = [gt_bboxes, anc_t, is_in_topk, iou_threshold]
    out_shape = [jax.ShapeDtypeStruct((B, 1, Lp), jnp.float32),
                 jax.ShapeDtypeStruct((B, 1, Lp), jnp.int32)]
    out_specs = [pl.BlockSpec((1, 1, l_tile), lambda b, l: (b, 0, l)),
                 pl.BlockSpec((1, 1, l_tile), lambda b, l: (b, 0, l))]
    if with_pred:
        in_specs.append(pl.BlockSpec((1, 4, l_tile), lambda b, l: (b, 0, l)))
        inputs.append(pred_t)
        out_shape.append(jax.ShapeDtypeStruct((B, 1, Lp), jnp.float32))
        out_specs.append(pl.BlockSpec((1, 1, l_tile), lambda b, l: (b, 0, l)))
    return pl.pallas_call(
        _make_assign_kernel(with_pred),
        out_shape=tuple(out_shape),
        grid=(B, n_l),
        in_specs=in_specs,
        out_specs=tuple(out_specs),
        compiler_params=pltpu.CompilerParams(
            dimension_semantics=("parallel", "parallel"),
            vmem_limit_bytes=vmem_limit),
    )(*inputs)


# ------------------------------ plain-JAX glue ------------------------------ #

def _gather_topk_pyramid(gt2anchor_dist2, num_anchors_list, pad_gt_mask, topk, pad_to):
    """Per-pyramid-level top-k.  Membership via scatter-add (no [B,M,topk,na]
    one-hot intermediate); padded-gt rows are explicitly zeroed, and the
    anchor-axis padding to `pad_to` is folded into the final concat."""
    B, M, _ = gt2anchor_dist2.shape
    pad_mask = pad_gt_mask > 0.5                                   # [B, M, 1] bool
    total = int(sum(num_anchors_list))
    offsets = [0] + [int(x) for x in np.cumsum(num_anchors_list)[:-1]]
    b_idx = jnp.arange(B)[:, None, None]
    m_idx = jnp.arange(M)[None, :, None]
    is_in_topk_list, topk_idxs_list = [], []
    start = 0
    for na, off in zip(num_anchors_list, offsets):
        dist = gt2anchor_dist2[:, :, start:start + na]
        start += na
        _, topk_idxs = jax.lax.top_k(-dist, topk)                  # k smallest
        topk_idxs_list.append(topk_idxs + off)
        # top_k indices are distinct per row -> counts are 0/1; zero padded-gt rows.
        # TODO(synk): XLA scatter can be slow for very large levels; a compare-based
        # membership would avoid it if this ever dominates the profile.
        counts = jnp.zeros((B, M, na), jnp.int32).at[b_idx, m_idx, topk_idxs].add(1)
        counts = jnp.where(pad_mask, counts, 0)
        is_in_topk_list.append(counts.astype(jnp.bfloat16))         # 0/1 -> exact
    if pad_to > total:
        is_in_topk_list.append(jnp.zeros((B, M, pad_to - total), jnp.bfloat16))
    return (jnp.concatenate(is_in_topk_list, axis=-1),
            jnp.concatenate(topk_idxs_list, axis=-1))


def _pair_iou_xyxy(box1, box2, eps=EPS_IOU):
    """Elementwise (broadcast) IoU of xyxy boxes; same math as the assign kernel."""
    x1 = jnp.maximum(box1[..., 0], box2[..., 0])
    y1 = jnp.maximum(box1[..., 1], box2[..., 1])
    x2 = jnp.minimum(box1[..., 2], box2[..., 2])
    y2 = jnp.minimum(box1[..., 3], box2[..., 3])
    inter = jnp.maximum(x2 - x1, 0.0) * jnp.maximum(y2 - y1, 0.0)
    area1 = (box1[..., 2] - box1[..., 0]) * (box1[..., 3] - box1[..., 1])
    area2 = (box2[..., 2] - box2[..., 0]) * (box2[..., 3] - box2[..., 1])
    return inter / jnp.maximum(area1 + area2 - inter, eps)


def atss_assign(anchor_bboxes, num_anchors_list, gt_labels, gt_bboxes,
                pad_gt_mask, bg_index, gt_scores=None, pred_bboxes=None,
                topk=TOPK, num_classes=NUM_CLASSES, force_gt_matching=False):
    assert gt_labels.ndim == gt_bboxes.ndim == 3
    L = anchor_bboxes.shape[0]
    assert int(sum(num_anchors_list)) == L
    B, M, _ = gt_bboxes.shape
    if M == 0:
        return (jnp.full((B, L), bg_index, dtype=jnp.int32),
                jnp.zeros((B, L, 4), jnp.float32),
                jnp.zeros((B, L, num_classes), jnp.float32))
    if force_gt_matching:
        # TODO(synk): force_gt_matching=True branch (compute_max_iou_gt) not implemented.
        raise NotImplementedError
    if gt_scores is not None and pred_bboxes is None:
        raise NotImplementedError  # matches PyTorch behavior

    vmem_limit, budget = _vmem_config()
    l_tile, Lp = _choose_tiling(B, M, L, budget)

    anc_t = jnp.transpose(anchor_bboxes.astype(jnp.float32))        # [4, L]
    anc_t = jnp.pad(anc_t, ((0, 0), (0, Lp - L)))                   # [4, Lp]
    gt_bboxes_f = gt_bboxes.astype(jnp.float32)

    # Pallas kernel 1: squared gt-center <-> anchor-center distance
    dist2 = _gt2anchor_dist2(gt_bboxes_f, anc_t, l_tile, vmem_limit)  # [B, M, Lp]

    # per-pyramid-level topk selection (plain JAX: data-dependent sort)
    is_in_topk, topk_idxs = _gather_topk_pyramid(
        dist2, num_anchors_list, pad_gt_mask, topk, pad_to=Lp)

    # mean+std IoU threshold from the B*M*K candidates only — the full [B, M, L]
    # IoU tensor is never materialized.
    anchor_f = anchor_bboxes.astype(jnp.float32)
    cand_iou = _pair_iou_xyxy(gt_bboxes_f[:, :, None, :],
                              jnp.take(anchor_f, topk_idxs, axis=0))
    cand = cand_iou * jnp.take_along_axis(is_in_topk, topk_idxs,
                                          axis=-1).astype(jnp.float32)
    iou_threshold = (jnp.mean(cand, axis=-1, keepdims=True)
                     + jnp.std(cand, axis=-1, ddof=1, keepdims=True))   # [B, M, 1]

    pred_t = None
    if pred_bboxes is not None:
        pred_t = jnp.transpose(pred_bboxes.astype(jnp.float32), (0, 2, 1))  # [B,4,L]
        pred_t = jnp.pad(pred_t, ((0, 0), (0, 0), (0, Lp - L)))

    # Pallas kernel 2: IoU recompute + threshold + inside-gt + positive-mask
    # resolution + per-anchor argmax (+ fused gt<->pred IoU max when requested).
    outs = _positive_assignment(gt_bboxes_f, anc_t, is_in_topk, iou_threshold,
                                pred_t, l_tile, vmem_limit)
    if pred_bboxes is not None:
        mps, agi, pio = outs
    else:
        mps, agi = outs
    mask_positive_sum = mps[:, 0, :L]                               # [B, L]
    assigned_gt_index = agi[:, 0, :L]                               # [B, L]

    batch_ind = jnp.arange(B, dtype=assigned_gt_index.dtype)[:, None]
    flat_index = (assigned_gt_index + batch_ind * M).reshape(-1)
    assigned_labels = gt_labels.reshape(-1)[flat_index].reshape(B, L)
    assigned_labels = jnp.where(mask_positive_sum > 0, assigned_labels,
                                jnp.full_like(assigned_labels, bg_index))
    assigned_bboxes = gt_bboxes.reshape(-1, 4)[flat_index].reshape(B, L, 4)
    assigned_scores = jax.nn.one_hot(assigned_labels, num_classes + 1,
                                     dtype=jnp.float32)[:, :, :num_classes]
    if pred_bboxes is not None:
        assigned_scores = assigned_scores * pio[:, 0, :L][..., None]
    return assigned_labels.astype(jnp.int32), assigned_bboxes, assigned_scores


# ---------------------------------- main ----------------------------------- #

if __name__ == "__main__":
    key = jax.random.PRNGKey(0)
    B, M = 2, 8
    bg_index = NUM_CLASSES
    feat_sizes = [(8, 8), (4, 4)]
    strides = [8, 16]
    num_anchors_list = [h * w for h, w in feat_sizes]            # [64, 16] -> L = 80

    # deterministic ATSS anchors (grid_cell_size = 5.0 like PPYOLOE)
    anchors = []
    for (h, w), s in zip(feat_sizes, strides):
        yy, xx = jnp.meshgrid(jnp.arange(h, dtype=jnp.float32),
                              jnp.arange(w, dtype=jnp.float32), indexing="ij")
        cx = (xx + 0.5) * s
        cy = (yy + 0.5) * s
        half = 2.5 * s
        a = jnp.stack([cx - half, cy - half, cx + half, cy + half], axis=-1)
        anchors.append(a.reshape(-1, 4))
    anchor_bboxes = jnp.concatenate(anchors, axis=0)             # [80, 4]
    L = sum(num_anchors_list)

    k1, k2, k3, k4 = jax.random.split(key, 4)
    ctr = jax.random.uniform(k1, (B, M, 2), minval=8.0, maxval=56.0)
    wh = jax.random.uniform(k2, (B, M, 2), minval=8.0, maxval=32.0)
    gt_bboxes = jnp.concatenate([ctr - wh * 0.5, ctr + wh * 0.5], axis=-1)
    gt_labels = jax.random.randint(k3, (B, M, 1), 0, NUM_CLASSES, dtype=jnp.int32)
    num_real = jnp.array([5, 3])
    pad_gt_mask = (jnp.arange(M)[None, :, None]
                   < num_real[:, None, None]).astype(jnp.float32)

    # default path (hard one-hot scores)
    labels, bboxes, scores = atss_assign(
        anchor_bboxes, num_anchors_list, gt_labels, gt_bboxes, pad_gt_mask, bg_index)
    jax.block_until_ready((labels, bboxes, scores))
    assert labels.shape == (B, L)
    assert bboxes.shape == (B, L, 4)
    assert scores.shape == (B, L, NUM_CLASSES)
    assert bool(jnp.all(jnp.isfinite(bboxes))) and bool(jnp.all(jnp.isfinite(scores)))

    # pred_bboxes path (exercises the fused gt<->pred IoU / soft-score kernel variant)
    acxy = (anchor_bboxes[:, 0:2] + anchor_bboxes[:, 2:4]) * 0.5
    noise = jax.random.uniform(k4, (B, L, 4), minval=-4.0, maxval=4.0)
    pred_bboxes = jnp.concatenate([acxy[None] - 12.0, acxy[None] + 12.0], axis=-1) + noise
    labels_p, bboxes_p, scores_p = atss_assign(
        anchor_bboxes, num_anchors_list, gt_labels, gt_bboxes, pad_gt_mask,
        bg_index, pred_bboxes=pred_bboxes)
    jax.block_until_ready((labels_p, bboxes_p, scores_p))
    assert labels_p.shape == (B, L)
    assert bboxes_p.shape == (B, L, 4)
    assert scores_p.shape == (B, L, NUM_CLASSES)
    assert bool(jnp.all(jnp.isfinite(scores_p)))

    print("KERNEL_OK")
</pallas_src>

<mosaic_0001>
module attributes {stable_mosaic.version = 11 : i64} {
  func.func @_dist2_kernel(%arg0: i32, %arg1: i32, %arg2: memref<1x8x4xf32, #tpu.memory_space<vmem>>, %arg3: memref<4x128xf32, #tpu.memory_space<vmem>>, %arg4: memref<1x8x128xf32, #tpu.memory_space<vmem>>) attributes {dimension_semantics = [#tpu.dimension_semantics<parallel>, #tpu.dimension_semantics<parallel>], iteration_bounds = array<i64: 2, 1>, scalar_prefetch = 0 : i64, scratch_operands = 0 : i64, tpu.core_type = #tpu.core_type<tc>, window_params = [{transform_indices = @transform_0, window_bounds = array<i64: 1, 8, 4>}, {transform_indices = @transform_1, window_bounds = array<i64: 4, 128>}, {transform_indices = @transform_2, window_bounds = array<i64: 1, 8, 128>}]} {
    %c0 = arith.constant 0 : index
    %c0_0 = arith.constant 0 : index
    %c0_1 = arith.constant 0 : index
    %0 = vector.load %arg2[%c0, %c0_0, %c0_1] : memref<1x8x4xf32, #tpu.memory_space<vmem>>, vector<1x8x4xf32>
    %1 = vector.shape_cast %0 : vector<1x8x4xf32> to vector<8x4xf32>
    %c0_2 = arith.constant 0 : index
    %c0_3 = arith.constant 0 : index
    %2 = vector.load %arg3[%c0_2, %c0_3] : memref<4x128xf32, #tpu.memory_space<vmem>>, vector<4x128xf32>
    %3 = vector.extract_strided_slice %1 {offsets = [0, 0], sizes = [8, 1], strides = [1, 1]} : vector<8x4xf32> to vector<8x1xf32>
    %4 = vector.extract_strided_slice %1 {offsets = [0, 2], sizes = [8, 1], strides = [1, 1]} : vector<8x4xf32> to vector<8x1xf32>
    %5 = arith.addf %3, %4 : vector<8x1xf32>
    %cst = arith.constant 5.000000e-01 : f32
    %6 = vector.broadcast %cst : f32 to vector<8x1xf32>
    %7 = arith.mulf %5, %6 : vector<8x1xf32>
    %8 = vector.extract_strided_slice %1 {offsets = [0, 1], sizes = [8, 1], strides = [1, 1]} : vector<8x4xf32> to vector<8x1xf32>
    %9 = vector.extract_strided_slice %1 {offsets = [0, 3], sizes = [8, 1], strides = [1, 1]} : vector<8x4xf32> to vector<8x1xf32>
    %10 = arith.addf %8, %9 : vector<8x1xf32>
    %cst_4 = arith.constant 5.000000e-01 : f32
    %11 = vector.broadcast %cst_4 : f32 to vector<8x1xf32>
    %12 = arith.mulf %10, %11 : vector<8x1xf32>
    %13 = vector.extract_strided_slice %2 {offsets = [0, 0], sizes = [1, 128], strides = [1, 1]} : vector<4x128xf32> to vector<1x128xf32>
    %14 = vector.extract_strided_slice %2 {offsets = [2, 0], sizes = [1, 128], strides = [1, 1]} : vector<4x128xf32> to vector<1x128xf32>
    %15 = arith.addf %13, %14 : vector<1x128xf32>
    %cst_5 = arith.constant 5.000000e-01 : f32
    %16 = vector.broadcast %cst_5 : f32 to vector<1x128xf32>
    %17 = arith.mulf %15, %16 : vector<1x128xf32>
    %18 = vector.extract_strided_slice %2 {offsets = [1, 0], sizes = [1, 128], strides = [1, 1]} : vector<4x128xf32> to vector<1x128xf32>
    %19 = vector.extract_strided_slice %2 {offsets = [3, 0], sizes = [1, 128], strides = [1, 1]} : vector<4x128xf32> to vector<1x128xf32>
    %20 = arith.addf %18, %19 : vector<1x128xf32>
    %cst_6 = arith.constant 5.000000e-01 : f32
    %21 = vector.broadcast %cst_6 : f32 to vector<1x128xf32>
    %22 = arith.mulf %20, %21 : vector<1x128xf32>
    %23 = vector.broadcast %7 : vector<8x1xf32> to vector<8x128xf32>
    %24 = vector.broadcast %17 : vector<1x128xf32> to vector<8x128xf32>
    %25 = arith.subf %23, %24 : vector<8x128xf32>
    %26 = vector.broadcast %12 : vector<8x1xf32> to vector<8x128xf32>
    %27 = vector.broadcast %22 : vector<1x128xf32> to vector<8x128xf32>
    %28 = arith.subf %26, %27 : vector<8x128xf32>
    %29 = arith.mulf %25, %25 : vector<8x128xf32>
    %30 = arith.mulf %28, %28 : vector<8x128xf32>
    %31 = arith.addf %29, %30 : vector<8x128xf32>
    %c0_7 = arith.constant 0 : index
    %c0_8 = arith.constant 0 : index
    %c0_9 = arith.constant 0 : index
    %32 = vector.load %arg4[%c0_7, %c0_8, %c0_9] : memref<1x8x128xf32, #tpu.memory_space<vmem>>, vector<1x8x128xf32>
    %33 = vector.shape_cast %32 : vector<1x8x128xf32> to vector<8x128xf32>
    %34 = vector.shape_cast %31 : vector<8x128xf32> to vector<1x8x128xf32>
    tpu.vector_store %arg4[%c0_7, %c0_8, %c0_9], %34 {strides = array<i32>} : memref<1x8x128xf32, #tpu.memory_space<vmem>>, vector<1x8x128xf32>,
    return
  }
  func.func @transform_0(%arg0: i32, %arg1: i32) -> (i32, i32, i32) {
    %c0_i32 = arith.constant 0 : i32
    %c0_i32_0 = arith.constant 0 : i32
    %c0_i32_1 = arith.constant 0 : i32
    return %arg0, %c0_i32, %c0_i32_0 : i32, i32, i32
  }
  func.func @transform_1(%arg0: i32, %arg1: i32) -> (i32, i32) {
    %c0_i32 = arith.constant 0 : i32
    %c0_i32_0 = arith.constant 0 : i32
    return %c0_i32, %arg1 : i32, i32
  }
  func.func @transform_2(%arg0: i32, %arg1: i32) -> (i32, i32, i32) {
    %c0_i32 = arith.constant 0 : i32
    %c0_i32_0 = arith.constant 0 : i32
    return %arg0, %c0_i32, %arg1 : i32, i32, i32
  }
}

</mosaic_0001>

<llo_original>
// kernel: tpu_custom_call.1
$region0: #{tpu_custom_call.1}
  #allocation0 [shape = 'u32[]', space=smem, size = 0x4, offset = 0x4, fixed_abs, tag = 'smem constant byte address 0x4 - core index']
  #allocation1 [shape = 'u32[144,128]{1,0:T(1,128)}', space=vmem, size = 0x12000, scoped, tag = 'internal scratch']
  %s0 = inlined_call_operand.vmem [shape: f32[2,8,4], index: 0, kind: input, shape index: {}]
  %s1 = inlined_call_operand.vmem [shape: f32[4,128], index: 1, kind: input, shape index: {}]
  %s2 = inlined_call_operand.hbm [shape: f32[2,8,128], index: 2, kind: output, shape index: {}]
  %s3 = sld [smem:[#allocation0]]
  $region41: #{tpu_custom_call.1} parent=0
    _
  %s5 = ssub.s32 1, %s3
  %s6 = scalar_select 0, %s5, %s3
  $region1: #{tpu_custom_call.1} parent=0
    #allocation2 [shape = 'u8[8192]{0}', space=vmem, size = 0x2000, scoped, tag = 'output window, operand 0']
    #allocation3 [shape = 's32[2]{0}', space=sflag, size = 0x8, scoped, tag = 'scoped memory for tpu_custom_call.1']
    %7 = vsyncpa [#allocation3], 0
    %s8 = scalar_lea.sflag [#allocation3], 1
    %9 = vsyncpa %s8, 0
    loop: start=0, step=1, limit=4
    $region2: #{tpu_custom_call.1} parent=1 // loop_pre_header
      _
    $region3: #{tpu_custom_call.1} parent=1 // loop_header
      %s11 = sphi 0, %s15
      %p12 = scmp.ge.s32.totalorder %s11, 4
      %s18 = sphi 0, %s30
      %s19 = sphi 0, %s26
      %s20 = sphi 0, %s18
      %s21 = sphi 0, %s19
      %s22 = sphi 0, %s20
      %s23 = sphi 0, %s21
      %s33 = sphi 0, %s35
      %s36 = sphi 0, %s33
      %s37 = sphi 0, %s36
      %s53 = sphi 0, %s37
      %s59 = sphi 0, %s61
      %s62 = sphi 0, %s59
      %s63 = sphi 0, %s62
      %s79 = sphi 0, %s63
      %s87 = sphi 0, %s89
      %s90 = sphi 0, %s87
      %s91 = sphi 0, %s90
      %s107 = sphi 0, %s91
    $region4: #{tpu_custom_call.1} parent=1 // loop_header_branch
      %14 = sbr.rel (%p12) target = $region8
    $region5: #{tpu_custom_call.1} parent=1 // loop_body
      %s16 = ssub.s32 %s11, 1
      %s17 = ssub.s32 %s11, 2
      %s24 = sadd.s32 1, %s19
      %p25 = scmp.ge.s32.totalorder %s24, 1
      %s26 = scalar_select %p25, 0, %s24
      %s27 = sadd.s32 1, %s18
      %s28 = scalar_select %p25, %s27, %s18
      %p29 = scmp.ge.s32.totalorder %s28, 2
      %s30 = scalar_select %p29, 0, %s28
      %s31 = ssub.s32 %s18, %s30
      %p32 = scmp.eq.s32.totalorder %s31, 0
      %s34 = sadd.s32 %s33, 1
      %s35 = scalar_select %p32, %s33, %s34
      %p38 = pneg %p32
      %p39 = scmp.eq.s32.totalorder %s11, 1
      %p40 = por %p38, %p39
      %p41 = scmp.ne.s32.totalorder %s33, %s36
      %p42 = scmp.eq.s32.totalorder %s11, 0
      %p43 = por %p41, %p42
      %p44 = scmp.ne.s32.totalorder %s33, %s36
      %p45 = scmp.eq.s32.totalorder %s16, 1
      %p46 = por %p44, %p45
      %p47 = scmp.ne.s32.totalorder %s36, %s37
      %p48 = scmp.eq.s32.totalorder %s16, 0
      %p49 = por %p47, %p48
      %p50 = scmp.ne.s32.totalorder %s36, %s37
      %p51 = scmp.eq.s32.totalorder %s17, 1
      %p52 = por %p50, %p51
      %p54 = scmp.ne.s32.totalorder %s37, %s53
      %p55 = scmp.eq.s32.totalorder %s17, 0
      %p56 = por %p54, %p55
      %s57 = ssub.s32 %s19, %s26
      %p58 = scmp.eq.s32.totalorder %s57, 0
      %s60 = sadd.s32 %s59, 1
      %s61 = scalar_select %p58, %s59, %s60
      %p64 = pneg %p58
      %p65 = scmp.eq.s32.totalorder %s11, 1
      %p66 = por %p64, %p65
      %p67 = scmp.ne.s32.totalorder %s59, %s62
      %p68 = scmp.eq.s32.totalorder %s11, 0
      %p69 = por %p67, %p68
      %p70 = scmp.ne.s32.totalorder %s59, %s62
      %p71 = scmp.eq.s32.totalorder %s16, 1
      %p72 = por %p70, %p71
      %p73 = scmp.ne.s32.totalorder %s62, %s63
      %p74 = scmp.eq.s32.totalorder %s16, 0
      %p75 = por %p73, %p74
      %p76 = scmp.ne.s32.totalorder %s62, %s63
      %p77 = scmp.eq.s32.totalorder %s17, 1
      %p78 = por %p76, %p77
      %p80 = scmp.ne.s32.totalorder %s63, %s79
      %p81 = scmp.eq.s32.totalorder %s17, 0
      %p82 = por %p80, %p81
      %s83 = ssub.s32 %s18, %s30
      %s84 = ssub.s32 %s19, %s26
      %s85 = sor.u32 %s83, %s84
      %p86 = scmp.eq.s32.totalorder %s85, 0
      %s88 = sadd.s32 %s87, 1
      %s89 = scalar_select %p86, %s87, %s88
      %p92 = pneg %p86
      %p93 = scmp.eq.s32.totalorder %s11, 1
      %p94 = por %p92, %p93
      %p95 = scmp.ne.s32.totalorder %s87, %s90
      %p96 = scmp.eq.s32.totalorder %s11, 0
      %p97 = por %p95, %p96
      %p98 = scmp.ne.s32.totalorder %s87, %s90
      %p99 = scmp.eq.s32.totalorder %s16, 1
      %p100 = por %p98, %p99
      %p101 = scmp.ne.s32.totalorder %s90, %s91
      %p102 = scmp.eq.s32.totalorder %s16, 0
      %p103 = por %p101, %p102
      %p104 = scmp.ne.s32.totalorder %s90, %s91
      %p105 = scmp.eq.s32.totalorder %s17, 1
      %p106 = por %p104, %p105
      %p108 = scmp.ne.s32.totalorder %s91, %s107
      %p109 = scmp.eq.s32.totalorder %s17, 0
      %p110 = por %p108, %p109
      %p111 = scmp.le.s32.totalorder 1, %s11
      %p112 = scmp.lt.s32.totalorder %s11, 3
      %p113 = pnand %p111, %p112
      %p114 = pneg %p113
      // Predicated region
      $region9: #{tpu_custom_call.1} parent=5 // pred_check
        _
      $region10: #{tpu_custom_call.1} parent=5 // pred_check_branch
        %116 = sbr.rel (%p113) target = $region12
      $region11: #{tpu_custom_call.1} parent=5 // pred_region
        %s117 = ssub.s32 %s11, 1
        // Predicated region
        $region13: #{tpu_custom_call.1} parent=11 // pred_check
          %p118 = pneg %p75
        $region14: #{tpu_custom_call.1} parent=11 // pred_check_branch
          %120 = sbr.rel (%p118) target = $region16
        $region15: #{tpu_custom_call.1} parent=11 // pred_region
          %p121 = scmp.lt.s32.totalorder %s21, 0
          %s122 = scalar_select %p121, %s21, 0
          %s123 = smul.addr %s122, 4
          %s124 = scalar_lea.vmem %s1, %s123
        $region16: #{tpu_custom_call.1} parent=11 // pred_fallthru
          _
      $region12: #{tpu_custom_call.1} parent=5 // pred_fallthru
        _
      %p125 = scmp.lt.s32.totalorder %s11, 2
      // Predicated region
      $region17: #{tpu_custom_call.1} parent=5 // pred_check
        %p126 = pneg %p125
      $region18: #{tpu_custom_call.1} parent=5 // pred_check_branch
        %128 = sbr.rel (%p126) target = $region20
      $region19: #{tpu_custom_call.1} parent=5 // pred_region
        // Predicated region
        $region21: #{tpu_custom_call.1} parent=19 // pred_check
          %p129 = pneg %p43
        $region22: #{tpu_custom_call.1} parent=19 // pred_check_branch
          %131 = sbr.rel (%p129) target = $region24
        $region23: #{tpu_custom_call.1} parent=19 // pred_region
          %p132 = scmp.lt.s32.totalorder %s18, 1
          %s133 = scalar_select %p132, %s18, 1
          %s134 = smul.addr %s133, 8
          %s135 = scalar_lea.vmem %s0, %s134
        $region24: #{tpu_custom_call.1} parent=19 // pred_fallthru
          _
      $region20: #{tpu_custom_call.1} parent=5 // pred_fallthru
        _
      %p136 = scmp.le.s32.totalorder 1, %s11
      %p137 = scmp.lt.s32.totalorder %s11, 3
      %p138 = pnand %p136, %p137
      %p139 = pneg %p138
      // Predicated region
      $region25: #{tpu_custom_call.1} parent=5 // pred_check
        _
      $region26: #{tpu_custom_call.1} parent=5 // pred_check_branch
        %141 = sbr.rel (%p138) target = $region28
      $region27: #{tpu_custom_call.1} parent=5 // pred_region
        %s142 = ssub.s32 %s11, 1
        %p143 = scmp.lt.s32.totalorder %s20, 1
        %s144 = scalar_select %p143, %s20, 1
        %s145 = smul.addr %s144, 8
        %s146 = scalar_lea.vmem %s0, %s145
        %p147 = pneg %p49
        %p148 = pneg %p46
        %p149 = scmp.lt.s32.totalorder %s21, 0
        %s150 = scalar_select %p149, %s21, 0
        %s151 = smul.addr %s150, 4
        %s152 = scalar_lea.vmem %s1, %s151
        %p153 = pneg %p75
        %p154 = pneg %p72
        %p155 = pneg %p103
        %p156 = pneg %p100
        %s157 = sand.u32 %s90, 1
        %s158 = scalar_lea.sflag [#allocation3], %s157
        %s159 = sand.u32 %s90, 1
        %s160 = smul.addr %s159, 8
        %s161 = scalar_lea.vmem [#allocation2], %s160
        %p162 = scmp.lt.s32.totalorder %s20, 1
        %s163 = scalar_select %p162, %s20, 1
        %s164 = smul.addr %s163, 8
        %s165 = scalar_lea.vmem %s0, %s164
        %p166 = scmp.lt.s32.totalorder %s21, 0
        %s167 = scalar_select %p166, %s21, 0
        %s168 = smul.addr %s167, 4
        %s169 = scalar_lea.vmem %s1, %s168
        %v170 = vld [vmem:[%s165] sm:$0xff]
        %v171 = vld [vmem:[%s169] sm:$0xf]
        %173 = vrot.lane.b32.xlu0 %v170, 126
        %v174 = vpop.permute.xlu0 %173
        %v176 = vadd.f32 %v170, %v174
        %v177 = vmul.f32 %v176, 0.5
        %v179 = vrot.slane %v171, 2
        %v181 = vadd.f32 %v171, %v179
        %v182 = vmul.f32 %v181, 0.5
        %184 = vset.pattern.permute.xlu0 0
        %185 = vperm.xlu0 %184, %v177
        %v186 = vpop.permute.xlu0 %185
        %v188 = vlaneseq
        %v189 = vshrl.u32 %v188, 7
        %v190 = vsub.s32 0, %v189
        %v191 = vrot.slane %v182, %v190
        %v192 = vsub.f32 %v186, %v191
        %193 = vset.pattern.permute.xlu0 1
        %194 = vperm.xlu0 %193, %v177
        %v195 = vpop.permute.xlu0 %194
        %v197 = vlaneseq
        %v198 = vshrl.u32 %v197, 7
        %v199 = vsub.s32 1, %v198
        %v200 = vrot.slane %v182, %v199
        %v201 = vsub.f32 %v195, %v200
        %v202 = vmul.f32 %v192, %v192
        %v203 = vmul.f32 %v201, %v201
        %v204 = vadd.f32 %v202, %v203
        %205 = vst [vmem:[%s161] sm:$0xff] %v204
        %s206 = sand.u32 %s90, 1
        %s207 = scalar_lea.sflag [#allocation3], %s206
        %s208 = sand.u32 %s90, 1
        %s209 = smul.addr %s208, 8
        %s210 = scalar_lea.vmem [#allocation2], %s209
        // Predicated region
        $region29: #{tpu_custom_call.1} parent=27 // pred_check
          %p211 = pneg %p100
        $region30: #{tpu_custom_call.1} parent=27 // pred_check_branch
          %213 = sbr.rel (%p211) target = $region32
        $region31: #{tpu_custom_call.1} parent=27 // pred_region
          %s215 = ssub.s32 128, 128
          %216 = vsyncadd %s207, %s215
          %s217 = sadd.s32 %s21, %s20
          %s218 = smul.addr %s217, 128
          %s219 = scalar_lea.hbm %s2, %s218
          %s221 = sshll.u32 %s210, 4
          %s222 = int_to_ptr.vmem [resolvable:$true] %s221
          %224 = dma.vmem_to_hbm [thread:$0]  %s222, 128, %s219, %s207
        $region32: #{tpu_custom_call.1} parent=27 // pred_fallthru
          _
      $region28: #{tpu_custom_call.1} parent=5 // pred_fallthru
        _
      %p225 = scmp.le.s32.totalorder 2, %s11
      // Predicated region
      $region33: #{tpu_custom_call.1} parent=5 // pred_check
        %p226 = pneg %p225
      $region34: #{tpu_custom_call.1} parent=5 // pred_check_branch
        %228 = sbr.rel (%p226) target = $region36
      $region35: #{tpu_custom_call.1} parent=5 // pred_region
        %s229 = ssub.s32 %s11, 2
        // Predicated region
        $region37: #{tpu_custom_call.1} parent=35 // pred_check
          %p230 = pneg %p106
        $region38: #{tpu_custom_call.1} parent=35 // pred_check_branch
          %232 = sbr.rel (%p230) target = $region40
        $region39: #{tpu_custom_call.1} parent=35 // pred_region
          %s233 = sand.u32 %s91, 1
          %s234 = scalar_lea.sflag [#allocation3], %s233
          %s235 = sand.u32 %s91, 1
          %s236 = smul.addr %s235, 8
          %s237 = scalar_lea.vmem [#allocation2], %s236
          %238 = dma.done %s234, 128
        $region40: #{tpu_custom_call.1} parent=35 // pred_fallthru
          _
      $region36: #{tpu_custom_call.1} parent=5 // pred_fallthru
        _
    $region6: #{tpu_custom_call.1} parent=1 // loop_footer
      %s15 = sadd.s32 1, %s11
    $region7: #{tpu_custom_call.1} parent=1 // loop_footer_branch
      %10 = sbr.rel target = $region3
    $region8: #{tpu_custom_call.1} parent=1 // loop_exit
      _
    %239 = vsyncpa [#allocation3], 1
    %s240 = scalar_lea.sflag [#allocation3], 1
    %241 = vsyncpa %s240, 1

</llo_original>
